<compile_context>
chip_gen: v7x
topology: tpu7x:2x2x1
jax: 0.10.0
libtpu: 0.0.40
codegen_flags: <defaults>
</compile_context>

<pallas_src>
import functools

import jax
import jax.numpy as jnp
import numpy as np
from jax.experimental import pallas as pl
from jax.experimental.pallas import tpu as pltpu

EPS = 1e-5  # PyTorch BatchNorm2d default eps


# ---------------------------------------------------------------------------
# Fused kernel.  Grid = (phase, image):
#   phase 0 : accumulate conv sum / sum-of-squares (BN batch statistics)
#   phase 1 : recompute conv, apply folded BN affine + ReLU + 2x2 max-pool
# Refs:
#   x_ref   : (1, m3, 3*2*Cin)  dy-packed column-pair slab of one image
#   w0_ref  : (3*2*Cin, 2*Cout) packed weights, column shift 0
#   w1_ref  : (3*2*Cin, 2*Cout) packed weights, column shift +1
#   g_ref   : (1, Cout) BN gamma        b_ref : (1, Cout) BN beta
#   o_ref   : (1, ph, W/2, Cout) pooled output (last packed col is garbage)
#   acc_ref : (2, 2*Cout) VMEM scratch  [sum ; sum of squares]
#   ss_ref  : (2, Cout)   VMEM scratch  [scale ; shift]
# ---------------------------------------------------------------------------
def _convblock_kernel(x_ref, w0_ref, w1_ref, g_ref, b_ref, o_ref,
                      acc_ref, ss_ref, *, m2, w2, pw, ph, cout, inv_count):
    phase = pl.program_id(0)
    img = pl.program_id(1)

    # 3x3 valid conv with even/odd output columns packed along channels.
    # Two K=18 MXU dots (column shifts 0 and +1) replace six K=6 dots.
    slab3 = x_ref[0]                                         # (m3, 3*2*Cin)
    z2 = (jnp.dot(slab3[0:m2, :], w0_ref[...],
                  preferred_element_type=jnp.float32)
          + jnp.dot(slab3[1:1 + m2, :], w1_ref[...],
                    preferred_element_type=jnp.float32))     # (m2, 2*Cout)

    @pl.when((phase == 0) & (img == 0))
    def _init():
        acc_ref[...] = jnp.zeros_like(acc_ref)

    @pl.when(phase == 0)
    def _stats():
        # Row m = oh*w2 + j holds conv columns (2j, 2j+1); j == w2-1 is the
        # throw-away column -> mask it out of the statistics (in-kernel iota,
        # no HBM mask input).
        row = jax.lax.broadcasted_iota(jnp.int32, (m2, 1), 0)
        zm = jnp.where((row % w2) < pw, z2, 0.0)
        acc_ref[0:1, :] += jnp.sum(zm, axis=0, keepdims=True)
        acc_ref[1:2, :] += jnp.sum(zm * zm, axis=0, keepdims=True)

    @pl.when((phase == 1) & (img == 0))
    def _finalize():
        # Fold even/odd column halves, then fold the BN affine into a single
        # per-channel scale/shift.  The conv bias cancels exactly under
        # training-mode (batch-stat) normalization, so it never appears.
        s = acc_ref[0:1, :]
        q = acc_ref[1:2, :]
        s_c = s[:, :cout] + s[:, cout:]                      # (1, Cout)
        q_c = q[:, :cout] + q[:, cout:]
        mean = s_c * inv_count
        var = jnp.maximum(q_c * inv_count - mean * mean, 0.0)
        scale = g_ref[...] * jax.lax.rsqrt(var + EPS)
        ss_ref[0:1, :] = scale
        ss_ref[1:2, :] = b_ref[...] - mean * scale

    @pl.when(phase == 1)
    def _apply():
        scale = ss_ref[0:1, :]
        shift = ss_ref[1:2, :]
        y_even = jnp.maximum(z2[:, :cout] * scale + shift, 0.0)
        y_odd = jnp.maximum(z2[:, cout:] * scale + shift, 0.0)
        wmax = jnp.maximum(y_even, y_odd)                    # pool, column dir
        w4 = wmax.reshape(ph, 2, w2, cout)                   # free leading split
        # pool, row direction; ONE contiguous store per image.
        o_ref[0] = jnp.maximum(w4[:, 0, :, :], w4[:, 1, :, :])


# ---------------------------------------------------------------------------
# Wrapper: ConvBlock.forward, NCHW in / NCHW out (like the PyTorch module).
# ---------------------------------------------------------------------------
@jax.jit
def conv_block_forward(x_nchw, w_oihw, bias, gamma, beta):
    n, cin, h, w = x_nchw.shape
    cout, cin_w, kh, kw = w_oihw.shape
    assert (cin_w, kh, kw) == (cin, 3, 3), "ConvBlock uses a 3x3 kernel"
    if h % 2 or w % 2 or h < 4 or w < 4:
        raise NotImplementedError("even H, W >= 4 required")  # TODO(synk): odd sizes

    oh, ow = h - 2, w - 2                 # conv output (even by construction)
    ph, pw = oh // 2, ow // 2             # pooled output
    w2 = w // 2                           # column pairs
    m2 = oh * w2                          # flat conv rows per image
    cin2 = 2 * cin
    cout2 = 2 * cout
    k3 = 3 * cin2                         # packed contraction dim (=18 for cin=3)

    m3 = ((m2 + 1 + 7) // 8) * 8          # dy-packed slab rows (sublane aligned)
    rows_needed = 2 * w2 + m3             # flat slab rows consumed

    # ---- layout plumbing (cheap XLA on the tiny input / weights) ----
    x_nhwc = jnp.transpose(x_nchw, (0, 2, 3, 1)).astype(jnp.float32)   # (N,H,W,Cin)
    x_flat = x_nhwc.reshape(n, h * w2, cin2)                 # column pairs, free
    x_flat = jnp.pad(x_flat, ((0, 0), (0, rows_needed - h * w2), (0, 0)))
    # Lane-pack the three dy-shifted rows -> K = 3*2*Cin contraction per dot.
    slab3 = jnp.concatenate(
        [x_flat[:, 0:m3], x_flat[:, w2:w2 + m3], x_flat[:, 2 * w2:2 * w2 + m3]],
        axis=-1)                                             # (N, m3, 3*2*Cin)

    # Packed weights (same block structure as before, now stacked over dy so a
    # single K=18 dot per column shift covers all three kernel rows):
    #   w0 multiplies slab3[m]   (input cols 2j, 2j+1)
    #   w1 multiplies slab3[m+1] (input cols 2j+2, 2j+3)
    wt = jnp.transpose(w_oihw, (2, 3, 1, 0)).astype(jnp.float32)   # (3,3,Cin,Cout)
    zpad = jnp.zeros((cin, cout), jnp.float32)
    w0_rows, w1_rows = [], []
    for dy in range(3):
        wd0, wd1, wd2 = wt[dy, 0], wt[dy, 1], wt[dy, 2]            # (Cin, Cout)
        w0_rows.append(jnp.concatenate(
            [jnp.concatenate([wd0, wd1], axis=0),                  # even out col
             jnp.concatenate([zpad, wd0], axis=0)], axis=1))       # odd out col
        w1_rows.append(jnp.concatenate(
            [jnp.concatenate([wd2, zpad], axis=0),
             jnp.concatenate([wd1, wd2], axis=0)], axis=1))
    w0 = jnp.concatenate(w0_rows, axis=0)                    # (3*2Cin, 2Cout)
    w1 = jnp.concatenate(w1_rows, axis=0)

    gamma2 = gamma.reshape(1, cout).astype(jnp.float32)
    beta2 = beta.reshape(1, cout).astype(jnp.float32)
    # `bias` cancels exactly under batch-stat BatchNorm, so it is not needed.

    inv_count = 1.0 / float(n * oh * ow)

    kernel = functools.partial(_convblock_kernel, m2=m2, w2=w2, pw=pw, ph=ph,
                               cout=cout, inv_count=inv_count)

    pooled = pl.pallas_call(
        kernel,
        out_shape=jax.ShapeDtypeStruct((n, ph, w2, cout), jnp.float32),
        grid=(2, n),                                         # (phase, image)
        in_specs=[
            pl.BlockSpec((1, m3, k3), lambda p, i: (i, 0, 0)),
            pl.BlockSpec((k3, cout2), lambda p, i: (0, 0)),
            pl.BlockSpec((k3, cout2), lambda p, i: (0, 0)),
            pl.BlockSpec((1, cout), lambda p, i: (0, 0)),
            pl.BlockSpec((1, cout), lambda p, i: (0, 0)),
        ],
        # Output block index stays 0 through the stats phase, then follows the
        # image index -> each block is visited consecutively and flushed only
        # after phase 1 has written it.
        out_specs=pl.BlockSpec((1, ph, w2, cout), lambda p, i: (i * p, 0, 0, 0)),
        scratch_shapes=[pltpu.VMEM((2, cout2), jnp.float32),   # sum / sumsq
                        pltpu.VMEM((2, cout), jnp.float32)],   # scale / shift
        compiler_params=pltpu.CompilerParams(
            dimension_semantics=("arbitrary", "arbitrary"),
            vmem_limit_bytes=32 * 1024 * 1024),
    )(slab3, w0, w1, gamma2, beta2)

    out = pooled[:, :, :pw, :]                   # drop the throw-away pooled col
    return jnp.transpose(out, (0, 3, 1, 2))      # back to NCHW


# ---------------------------------------------------------------------------
# Pure-JAX reference (mirrors the PyTorch forward, training-mode batch norm)
# ---------------------------------------------------------------------------
def reference_forward(x_nchw, w_oihw, bias, gamma, beta):
    y = jax.lax.conv_general_dilated(
        x_nchw, w_oihw, window_strides=(1, 1), padding="VALID",
        dimension_numbers=("NCHW", "OIHW", "NCHW"))
    y = y + bias[None, :, None, None]
    mean = jnp.mean(y, axis=(0, 2, 3), keepdims=True)
    var = jnp.mean((y - mean) ** 2, axis=(0, 2, 3), keepdims=True)
    y = (y - mean) * jax.lax.rsqrt(var + EPS)
    y = y * gamma[None, :, None, None] + beta[None, :, None, None]
    y = jnp.maximum(y, 0.0)
    y = jax.lax.reduce_window(y, -jnp.inf, jax.lax.max,
                              (1, 1, 2, 2), (1, 1, 2, 2), "VALID")
    return y


if __name__ == "__main__":
    # Shapes implied by the module: indim=3 (default), 64 output channels, 3x3.
    N, CIN, H, W = 2, 3, 16, 16
    COUT, KH, KW = 64, 3, 3

    key = jax.random.PRNGKey(0)
    kx, kw_, kb, kg, kbeta = jax.random.split(key, 5)

    x = jax.random.normal(kx, (N, CIN, H, W), dtype=jnp.float32)
    conv_w = jax.random.normal(kw_, (COUT, CIN, KH, KW), dtype=jnp.float32) * 0.1
    conv_b = jax.random.normal(kb, (COUT,), dtype=jnp.float32) * 0.1
    bn_gamma = 1.0 + 0.1 * jax.random.normal(kg, (COUT,), dtype=jnp.float32)
    bn_beta = 0.1 * jax.random.normal(kbeta, (COUT,), dtype=jnp.float32)

    out = jax.block_until_ready(
        conv_block_forward(x, conv_w, conv_b, bn_gamma, bn_beta))
    ref = jax.block_until_ready(
        reference_forward(x, conv_w, conv_b, bn_gamma, bn_beta))

    assert out.shape == (N, COUT, (H - 2) // 2, (W - 2) // 2), out.shape
    np.testing.assert_allclose(np.asarray(out), np.asarray(ref),
                               rtol=2e-4, atol=2e-4)
    print("KERNEL_OK")
</pallas_src>

<mosaic_0001>
module attributes {stable_mosaic.version = 11 : i64} {
  func.func @_convblock_kernel(%arg0: i32, %arg1: i32, %arg2: memref<1x120x18xf32, #tpu.memory_space<vmem>>, %arg3: memref<18x128xf32, #tpu.memory_space<vmem>>, %arg4: memref<18x128xf32, #tpu.memory_space<vmem>>, %arg5: memref<1x64xf32, #tpu.memory_space<vmem>>, %arg6: memref<1x64xf32, #tpu.memory_space<vmem>>, %arg7: memref<1x7x8x64xf32, #tpu.memory_space<vmem>>, %arg8: memref<2x128xf32, #tpu.memory_space<vmem>>, %arg9: memref<2x64xf32, #tpu.memory_space<vmem>>) attributes {dimension_semantics = [#tpu.dimension_semantics<arbitrary>, #tpu.dimension_semantics<arbitrary>], iteration_bounds = array<i64: 2, 2>, scalar_prefetch = 0 : i64, scratch_operands = 2 : i64, tpu.core_type = #tpu.core_type<tc>, window_params = [{transform_indices = @transform_0, window_bounds = array<i64: 1, 120, 18>}, {pipeline_mode = #tpu.pipeline_mode<synchronous>, transform_indices = @transform_1, window_bounds = array<i64: 18, 128>}, {pipeline_mode = #tpu.pipeline_mode<synchronous>, transform_indices = @transform_2, window_bounds = array<i64: 18, 128>}, {pipeline_mode = #tpu.pipeline_mode<synchronous>, transform_indices = @transform_3, window_bounds = array<i64: 1, 64>}, {pipeline_mode = #tpu.pipeline_mode<synchronous>, transform_indices = @transform_4, window_bounds = array<i64: 1, 64>}, {transform_indices = @transform_5, window_bounds = array<i64: 1, 7, 8, 64>}]} {
    %c0 = arith.constant 0 : index
    %c0_0 = arith.constant 0 : index
    %c0_1 = arith.constant 0 : index
    %0 = vector.load %arg2[%c0, %c0_0, %c0_1] : memref<1x120x18xf32, #tpu.memory_space<vmem>>, vector<1x120x18xf32>
    %1 = vector.shape_cast %0 : vector<1x120x18xf32> to vector<120x18xf32>
    %2 = vector.extract_strided_slice %1 {offsets = [0, 0], sizes = [112, 18], strides = [1, 1]} : vector<120x18xf32> to vector<112x18xf32>
    %c0_2 = arith.constant 0 : index
    %c0_3 = arith.constant 0 : index
    %3 = vector.load %arg3[%c0_2, %c0_3] : memref<18x128xf32, #tpu.memory_space<vmem>>, vector<18x128xf32>
    %cst = arith.constant dense<0.000000e+00> : vector<112x128xf32>
    %4 = tpu.matmul %2, %3, %cst {dimension_numbers = #tpu.dot_dimension_numbers<[1], [0], [0], [1], [0, 0, 1, 1], [], []>} : vector<112x18xf32>, vector<18x128xf32>, vector<112x128xf32> -> vector<112x128xf32>
    %5 = vector.extract_strided_slice %1 {offsets = [1, 0], sizes = [112, 18], strides = [1, 1]} : vector<120x18xf32> to vector<112x18xf32>
    %c0_4 = arith.constant 0 : index
    %c0_5 = arith.constant 0 : index
    %6 = vector.load %arg4[%c0_4, %c0_5] : memref<18x128xf32, #tpu.memory_space<vmem>>, vector<18x128xf32>
    %cst_6 = arith.constant dense<0.000000e+00> : vector<112x128xf32>
    %7 = tpu.matmul %5, %6, %cst_6 {dimension_numbers = #tpu.dot_dimension_numbers<[1], [0], [0], [1], [0, 0, 1, 1], [], []>} : vector<112x18xf32>, vector<18x128xf32>, vector<112x128xf32> -> vector<112x128xf32>
    %8 = arith.addf %4, %7 : vector<112x128xf32>
    %c0_i32 = arith.constant 0 : i32
    %9 = arith.cmpi eq, %arg0, %c0_i32 : i32
    %c0_i32_7 = arith.constant 0 : i32
    %10 = arith.cmpi eq, %arg1, %c0_i32_7 : i32
    %11 = arith.andi %9, %10 : i1
    %12 = arith.extui %11 : i1 to i32
    %c0_i32_8 = arith.constant 0 : i32
    %13 = arith.cmpi ne, %12, %c0_i32_8 : i32
    scf.if %13 {
      %cst_15 = arith.constant 0.000000e+00 : f32
      %25 = vector.broadcast %cst_15 : f32 to vector<2x128xf32>
      %c0_16 = arith.constant 0 : index
      %c0_17 = arith.constant 0 : index
      %26 = vector.load %arg8[%c0_16, %c0_17] : memref<2x128xf32, #tpu.memory_space<vmem>>, vector<2x128xf32>
      tpu.vector_store %arg8[%c0_16, %c0_17], %25 {strides = array<i32>} : memref<2x128xf32, #tpu.memory_space<vmem>>, vector<2x128xf32>,
    } else {
    }
    %c0_i32_9 = arith.constant 0 : i32
    %14 = arith.cmpi eq, %arg0, %c0_i32_9 : i32
    %15 = arith.extui %14 : i1 to i32
    %c0_i32_10 = arith.constant 0 : i32
    %16 = arith.cmpi ne, %15, %c0_i32_10 : i32
    scf.if %16 {
      %25 = tpu.iota {dimensions = array<i32: 0>} : vector<112x1xi32>
      %c8_i32 = arith.constant 8 : i32
      %c0_i32_15 = arith.constant 0 : i32
      %26 = arith.cmpi eq, %c8_i32, %c0_i32_15 : i32
      %c1_i32_16 = arith.constant 1 : i32
      %27 = arith.select %26, %c1_i32_16, %c8_i32 : i32
      %28 = vector.broadcast %27 : i32 to vector<112x1xi32>
      %29 = arith.remsi %25, %28 : vector<112x1xi32>
      %c0_i32_17 = arith.constant 0 : i32
      %30 = vector.broadcast %c0_i32_17 : i32 to vector<112x1xi32>
      %31 = arith.cmpi ne, %29, %30 : vector<112x1xi32>
      %c0_i32_18 = arith.constant 0 : i32
      %32 = vector.broadcast %c0_i32_18 : i32 to vector<112x1xi32>
      %33 = arith.cmpi slt, %29, %32 : vector<112x1xi32>
      %c0_i32_19 = arith.constant 0 : i32
      %34 = arith.cmpi slt, %27, %c0_i32_19 : i32
      %35 = vector.broadcast %34 : i1 to vector<112x1xi1>
      %36 = vector.broadcast %35 : vector<112x1xi1> to vector<112x1xi1>
      %37 = arith.xori %33, %36 : vector<112x1xi1>
      %38 = arith.andi %37, %31 : vector<112x1xi1>
      %39 = vector.broadcast %27 : i32 to vector<112x1xi32>
      %40 = arith.addi %29, %39 : vector<112x1xi32>
      %41 = arith.select %38, %40, %29 : vector<112x1xi1>, vector<112x1xi32>
      %c7_i32 = arith.constant 7 : i32
      %42 = vector.broadcast %c7_i32 : i32 to vector<112x1xi32>
      %43 = arith.cmpi slt, %41, %42 : vector<112x1xi32>
      %cst_20 = arith.constant 0.000000e+00 : f32
      %44 = vector.shape_cast %43 : vector<112x1xi1> to vector<112x1xi1>
      %45 = vector.broadcast %44 : vector<112x1xi1> to vector<112x128xi1>
      %46 = vector.broadcast %cst_20 : f32 to vector<112x128xf32>
      %47 = arith.select %45, %8, %46 : vector<112x128xi1>, vector<112x128xf32>
      %c0_21 = arith.constant 0 : index
      %c0_22 = arith.constant 0 : index
      %48 = vector.load %arg8[%c0_21, %c0_22] : memref<2x128xf32, #tpu.memory_space<vmem>>, vector<1x128xf32>
      %cst_23 = arith.constant dense<0.000000e+00> : vector<128xf32>
      %49 = vector.multi_reduction <add>, %47, %cst_23 [0] : vector<112x128xf32> to vector<128xf32>
      %50 = vector.shape_cast %49 : vector<128xf32> to vector<1x128xf32>
      %51 = arith.addf %48, %50 : vector<1x128xf32>
      %c0_24 = arith.constant 0 : index
      %c0_25 = arith.constant 0 : index
      %52 = vector.load %arg8[%c0_24, %c0_25] : memref<2x128xf32, #tpu.memory_space<vmem>>, vector<1x128xf32>
      tpu.vector_store %arg8[%c0_24, %c0_25], %51 {strides = array<i32>} : memref<2x128xf32, #tpu.memory_space<vmem>>, vector<1x128xf32>,
      %c1 = arith.constant 1 : index
      %c0_26 = arith.constant 0 : index
      %53 = vector.load %arg8[%c1, %c0_26] : memref<2x128xf32, #tpu.memory_space<vmem>>, vector<1x128xf32>
      %54 = arith.mulf %47, %47 : vector<112x128xf32>
      %cst_27 = arith.constant dense<0.000000e+00> : vector<128xf32>
      %55 = vector.multi_reduction <add>, %54, %cst_27 [0] : vector<112x128xf32> to vector<128xf32>
      %56 = vector.shape_cast %55 : vector<128xf32> to vector<1x128xf32>
      %57 = arith.addf %53, %56 : vector<1x128xf32>
      %c1_28 = arith.constant 1 : index
      %c0_29 = arith.constant 0 : index
      %58 = vector.load %arg8[%c1_28, %c0_29] : memref<2x128xf32, #tpu.memory_space<vmem>>, vector<1x128xf32>
      tpu.vector_store %arg8[%c1_28, %c0_29], %57 {strides = array<i32>} : memref<2x128xf32, #tpu.memory_space<vmem>>, vector<1x128xf32>,
    } else {
    }
    %c1_i32 = arith.constant 1 : i32
    %17 = arith.cmpi eq, %arg0, %c1_i32 : i32
    %c0_i32_11 = arith.constant 0 : i32
    %18 = arith.cmpi eq, %arg1, %c0_i32_11 : i32
    %19 = arith.andi %17, %18 : i1
    %20 = arith.extui %19 : i1 to i32
    %c0_i32_12 = arith.constant 0 : i32
    %21 = arith.cmpi ne, %20, %c0_i32_12 : i32
    scf.if %21 {
      %c0_15 = arith.constant 0 : index
      %c0_16 = arith.constant 0 : index
      %25 = vector.load %arg8[%c0_15, %c0_16] : memref<2x128xf32, #tpu.memory_space<vmem>>, vector<1x128xf32>
      %c1 = arith.constant 1 : index
      %c0_17 = arith.constant 0 : index
      %26 = vector.load %arg8[%c1, %c0_17] : memref<2x128xf32, #tpu.memory_space<vmem>>, vector<1x128xf32>
      %27 = vector.extract_strided_slice %25 {offsets = [0, 0], sizes = [1, 64], strides = [1, 1]} : vector<1x128xf32> to vector<1x64xf32>
      %28 = vector.extract_strided_slice %25 {offsets = [0, 64], sizes = [1, 64], strides = [1, 1]} : vector<1x128xf32> to vector<1x64xf32>
      %29 = arith.addf %27, %28 : vector<1x64xf32>
      %30 = vector.extract_strided_slice %26 {offsets = [0, 0], sizes = [1, 64], strides = [1, 1]} : vector<1x128xf32> to vector<1x64xf32>
      %31 = vector.extract_strided_slice %26 {offsets = [0, 64], sizes = [1, 64], strides = [1, 1]} : vector<1x128xf32> to vector<1x64xf32>
      %32 = arith.addf %30, %31 : vector<1x64xf32>
      %cst_18 = arith.constant 0.00255102036 : f32
      %33 = vector.broadcast %cst_18 : f32 to vector<1x64xf32>
      %34 = arith.mulf %29, %33 : vector<1x64xf32>
      %cst_19 = arith.constant 0.00255102036 : f32
      %35 = vector.broadcast %cst_19 : f32 to vector<1x64xf32>
      %36 = arith.mulf %32, %35 : vector<1x64xf32>
      %37 = arith.mulf %34, %34 : vector<1x64xf32>
      %38 = arith.subf %36, %37 : vector<1x64xf32>
      %cst_20 = arith.constant 0.000000e+00 : f32
      %39 = vector.broadcast %cst_20 : f32 to vector<1x64xf32>
      %40 = arith.maximumf %38, %39 : vector<1x64xf32>
      %c0_21 = arith.constant 0 : index
      %c0_22 = arith.constant 0 : index
      %41 = vector.load %arg5[%c0_21, %c0_22] : memref<1x64xf32, #tpu.memory_space<vmem>>, vector<1x64xf32>
      %cst_23 = arith.constant 9.99999974E-6 : f32
      %42 = vector.broadcast %cst_23 : f32 to vector<1x64xf32>
      %43 = arith.addf %40, %42 : vector<1x64xf32>
      %44 = math.rsqrt %43 : vector<1x64xf32>
      %45 = arith.mulf %41, %44 : vector<1x64xf32>
      %c0_24 = arith.constant 0 : index
      %c0_25 = arith.constant 0 : index
      %46 = vector.load %arg9[%c0_24, %c0_25] : memref<2x64xf32, #tpu.memory_space<vmem>>, vector<1x64xf32>
      tpu.vector_store %arg9[%c0_24, %c0_25], %45 {strides = array<i32>} : memref<2x64xf32, #tpu.memory_space<vmem>>, vector<1x64xf32>,
      %c0_26 = arith.constant 0 : index
      %c0_27 = arith.constant 0 : index
      %47 = vector.load %arg6[%c0_26, %c0_27] : memref<1x64xf32, #tpu.memory_space<vmem>>, vector<1x64xf32>
      %48 = arith.mulf %34, %45 : vector<1x64xf32>
      %49 = arith.subf %47, %48 : vector<1x64xf32>
      %c1_28 = arith.constant 1 : index
      %c0_29 = arith.constant 0 : index
      %50 = vector.load %arg9[%c1_28, %c0_29] : memref<2x64xf32, #tpu.memory_space<vmem>>, vector<1x64xf32>
      tpu.vector_store %arg9[%c1_28, %c0_29], %49 {strides = array<i32>} : memref<2x64xf32, #tpu.memory_space<vmem>>, vector<1x64xf32>,
    } else {
    }
    %c1_i32_13 = arith.constant 1 : i32
    %22 = arith.cmpi eq, %arg0, %c1_i32_13 : i32
    %23 = arith.extui %22 : i1 to i32
    %c0_i32_14 = arith.constant 0 : i32
    %24 = arith.cmpi ne, %23, %c0_i32_14 : i32
    scf.if %24 {
      %c0_15 = arith.constant 0 : index
      %c0_16 = arith.constant 0 : index
      %25 = vector.load %arg9[%c0_15, %c0_16] : memref<2x64xf32, #tpu.memory_space<vmem>>, vector<1x64xf32>
      %c1 = arith.constant 1 : index
      %c0_17 = arith.constant 0 : index
      %26 = vector.load %arg9[%c1, %c0_17] : memref<2x64xf32, #tpu.memory_space<vmem>>, vector<1x64xf32>
      %27 = vector.extract_strided_slice %8 {offsets = [0, 0], sizes = [112, 64], strides = [1, 1]} : vector<112x128xf32> to vector<112x64xf32>
      %28 = vector.broadcast %25 : vector<1x64xf32> to vector<112x64xf32>
      %29 = arith.mulf %27, %28 : vector<112x64xf32>
      %30 = vector.broadcast %26 : vector<1x64xf32> to vector<112x64xf32>
      %31 = arith.addf %29, %30 : vector<112x64xf32>
      %cst_18 = arith.constant 0.000000e+00 : f32
      %32 = vector.broadcast %cst_18 : f32 to vector<112x64xf32>
      %33 = arith.maximumf %31, %32 : vector<112x64xf32>
      %34 = vector.extract_strided_slice %8 {offsets = [0, 64], sizes = [112, 64], strides = [1, 1]} : vector<112x128xf32> to vector<112x64xf32>
      %35 = vector.broadcast %25 : vector<1x64xf32> to vector<112x64xf32>
      %36 = arith.mulf %34, %35 : vector<112x64xf32>
      %37 = vector.broadcast %26 : vector<1x64xf32> to vector<112x64xf32>
      %38 = arith.addf %36, %37 : vector<112x64xf32>
      %cst_19 = arith.constant 0.000000e+00 : f32
      %39 = vector.broadcast %cst_19 : f32 to vector<112x64xf32>
      %40 = arith.maximumf %38, %39 : vector<112x64xf32>
      %41 = arith.maximumf %33, %40 : vector<112x64xf32>
      %42 = vector.shape_cast %41 : vector<112x64xf32> to vector<7x2x8x64xf32>
      %43 = vector.extract_strided_slice %42 {offsets = [0, 0, 0, 0], sizes = [7, 1, 8, 64], strides = [1, 1, 1, 1]} : vector<7x2x8x64xf32> to vector<7x1x8x64xf32>
      %44 = vector.shape_cast %43 : vector<7x1x8x64xf32> to vector<7x8x64xf32>
      %45 = vector.extract_strided_slice %42 {offsets = [0, 1, 0, 0], sizes = [7, 1, 8, 64], strides = [1, 1, 1, 1]} : vector<7x2x8x64xf32> to vector<7x1x8x64xf32>
      %46 = vector.shape_cast %45 : vector<7x1x8x64xf32> to vector<7x8x64xf32>
      %47 = arith.maximumf %44, %46 : vector<7x8x64xf32>
      %c0_20 = arith.constant 0 : index
      %c0_21 = arith.constant 0 : index
      %c0_22 = arith.constant 0 : index
      %c0_23 = arith.constant 0 : index
      %48 = vector.load %arg7[%c0_20, %c0_21, %c0_22, %c0_23] : memref<1x7x8x64xf32, #tpu.memory_space<vmem>>, vector<1x7x8x64xf32>
      %49 = vector.shape_cast %48 : vector<1x7x8x64xf32> to vector<7x8x64xf32>
      %50 = vector.shape_cast %47 : vector<7x8x64xf32> to vector<1x7x8x64xf32>
      tpu.vector_store %arg7[%c0_20, %c0_21, %c0_22, %c0_23], %50 {strides = array<i32>} : memref<1x7x8x64xf32, #tpu.memory_space<vmem>>, vector<1x7x8x64xf32>,
    } else {
    }
    return
  }
  func.func @transform_0(%arg0: i32, %arg1: i32) -> (i32, i32, i32) {
    %c0_i32 = arith.constant 0 : i32
    %c0_i32_0 = arith.constant 0 : i32
    %c0_i32_1 = arith.constant 0 : i32
    return %arg1, %c0_i32, %c0_i32_0 : i32, i32, i32
  }
  func.func @transform_1(%arg0: i32, %arg1: i32) -> (i32, i32) {
    %c0_i32 = arith.constant 0 : i32
    %c0_i32_0 = arith.constant 0 : i32
    %c0_i32_1 = arith.constant 0 : i32
    return %c0_i32, %c0_i32_0 : i32, i32
  }
  func.func @transform_2(%arg0: i32, %arg1: i32) -> (i32, i32) {
    %c0_i32 = arith.constant 0 : i32
    %c0_i32_0 = arith.constant 0 : i32
    %c0_i32_1 = arith.constant 0 : i32
    return %c0_i32, %c0_i32_0 : i32, i32
  }
  func.func @transform_3(%arg0: i32, %arg1: i32) -> (i32, i32) {
    %c0_i32 = arith.constant 0 : i32
    %c0_i32_0 = arith.constant 0 : i32
    %c0_i32_1 = arith.constant 0 : i32
    return %c0_i32, %c0_i32_0 : i32, i32
  }
  func.func @transform_4(%arg0: i32, %arg1: i32) -> (i32, i32) {
    %c0_i32 = arith.constant 0 : i32
    %c0_i32_0 = arith.constant 0 : i32
    %c0_i32_1 = arith.constant 0 : i32
    return %c0_i32, %c0_i32_0 : i32, i32
  }
  func.func @transform_5(%arg0: i32, %arg1: i32) -> (i32, i32, i32, i32) {
    %0 = arith.muli %arg1, %arg0 : i32
    %c0_i32 = arith.constant 0 : i32
    %c0_i32_0 = arith.constant 0 : i32
    %c0_i32_1 = arith.constant 0 : i32
    %c0_i32_2 = arith.constant 0 : i32
    return %0, %c0_i32, %c0_i32_0, %c0_i32_1 : i32, i32, i32, i32
  }
}

</mosaic_0001>

<llo_original>
// kernel: conv_block_forward.1
$region0: #{conv_block_forward.1}
  #allocation0 [shape = 'u32[]', space=smem, size = 0x4, offset = 0x4, fixed_abs, tag = 'smem constant byte address 0x4 - core index']
  #allocation1 [shape = 'u32[144,128]{1,0:T(1,128)}', space=vmem, size = 0x12000, scoped, tag = 'internal scratch']
  #allocation2 [shape = 'f32[2,128]{1,0:T(2,128)}', space=vmem, size = 0x400, scoped, tag = 'scratch operand']
  #allocation3 [shape = 'f32[2,64]{1,0:T(2,128)}', space=vmem, size = 0x400, scoped, tag = 'scratch operand']
  %s0 = inlined_call_operand.vmem [shape: f32[2,120,18], index: 0, kind: input, shape index: {}]
  %s1 = inlined_call_operand.vmem [shape: f32[18,128], index: 1, kind: input, shape index: {}]
  %s2 = inlined_call_operand.vmem [shape: f32[18,128], index: 2, kind: input, shape index: {}]
  %s3 = inlined_call_operand.vmem [shape: f32[1,64], index: 3, kind: input, shape index: {}]
  %s4 = inlined_call_operand.vmem [shape: f32[1,64], index: 4, kind: input, shape index: {}]
  %s5 = inlined_call_operand.vmem [shape: f32[2,7,8,64], index: 5, kind: output, shape index: {}]
  %s6 = sld [smem:[#allocation0]]
  $region69: #{conv_block_forward.1} parent=0
    _
  %s8 = ssub.s32 1, %s6
  %s9 = scalar_select 0, %s8, %s6
  loop: start=0, step=1, limit=6
  $region2: #{conv_block_forward.1} parent=0 // loop_pre_header
    _
  $region3: #{conv_block_forward.1} parent=0 // loop_header
    %s11 = sphi 0, %s15
    %p12 = scmp.ge.s32.totalorder %s11, 6
    %s18 = sphi 0, %s30
    %s19 = sphi 0, %s26
    %s20 = sphi 0, %s18
    %s21 = sphi 0, %s19
    %s22 = sphi 0, %s20
    %s23 = sphi 0, %s21
    %s33 = sphi 0, %s35
    %s36 = sphi 0, %s33
    %s37 = sphi 0, %s36
    %s53 = sphi 0, %s37
    %s57 = sphi 0, %s57
    %s59 = sphi 0, %s57
    %s60 = sphi 0, %s59
    %s74 = sphi 0, %s60
    %s78 = sphi 0, %s78
    %s80 = sphi 0, %s78
    %s81 = sphi 0, %s80
    %s95 = sphi 0, %s81
    %s99 = sphi 0, %s99
    %s101 = sphi 0, %s99
    %s102 = sphi 0, %s101
    %s116 = sphi 0, %s102
    %s120 = sphi 0, %s120
    %s122 = sphi 0, %s120
    %s123 = sphi 0, %s122
    %s137 = sphi 0, %s123
    %s145 = sphi 0, %s147
    %s148 = sphi 0, %s145
    %s149 = sphi 0, %s148
    %s165 = sphi 0, %s149
  $region4: #{conv_block_forward.1} parent=0 // loop_header_branch
    %14 = sbr.rel (%p12) target = $region8
  $region5: #{conv_block_forward.1} parent=0 // loop_body
    %s16 = ssub.s32 %s11, 1
    %s17 = ssub.s32 %s11, 2
    %s24 = sadd.s32 1, %s19
    %p25 = scmp.ge.s32.totalorder %s24, 2
    %s26 = scalar_select %p25, 0, %s24
    %s27 = sadd.s32 1, %s18
    %s28 = scalar_select %p25, %s27, %s18
    %p29 = scmp.ge.s32.totalorder %s28, 2
    %s30 = scalar_select %p29, 0, %s28
    %s31 = ssub.s32 %s19, %s26
    %p32 = scmp.eq.s32.totalorder %s31, 0
    %s34 = sadd.s32 %s33, 1
    %s35 = scalar_select %p32, %s33, %s34
    %p38 = pneg %p32
    %p39 = scmp.eq.s32.totalorder %s11, 3
    %p40 = por %p38, %p39
    %p41 = scmp.ne.s32.totalorder %s33, %s36
    %p42 = scmp.eq.s32.totalorder %s11, 0
    %p43 = por %p41, %p42
    %p44 = scmp.ne.s32.totalorder %s33, %s36
    %p45 = scmp.eq.s32.totalorder %s16, 3
    %p46 = por %p44, %p45
    %p47 = scmp.ne.s32.totalorder %s36, %s37
    %p48 = scmp.eq.s32.totalorder %s16, 0
    %p49 = por %p47, %p48
    %p50 = scmp.ne.s32.totalorder %s36, %s37
    %p51 = scmp.eq.s32.totalorder %s17, 3
    %p52 = por %p50, %p51
    %p54 = scmp.ne.s32.totalorder %s37, %s53
    %p55 = scmp.eq.s32.totalorder %s17, 0
    %p56 = por %p54, %p55
    %s58 = sadd.s32 %s57, 1
    %p61 = scmp.eq.s32.totalorder %s11, 3
    %p62 = scmp.ne.s32.totalorder %s57, %s59
    %p63 = scmp.eq.s32.totalorder %s11, 0
    %p64 = por %p62, %p63
    %p65 = scmp.ne.s32.totalorder %s57, %s59
    %p66 = scmp.eq.s32.totalorder %s16, 3
    %p67 = por %p65, %p66
    %p68 = scmp.ne.s32.totalorder %s59, %s60
    %p69 = scmp.eq.s32.totalorder %s16, 0
    %p70 = por %p68, %p69
    %p71 = scmp.ne.s32.totalorder %s59, %s60
    %p72 = scmp.eq.s32.totalorder %s17, 3
    %p73 = por %p71, %p72
    %p75 = scmp.ne.s32.totalorder %s60, %s74
    %p76 = scmp.eq.s32.totalorder %s17, 0
    %p77 = por %p75, %p76
    %s79 = sadd.s32 %s78, 1
    %p82 = scmp.eq.s32.totalorder %s11, 3
    %p83 = scmp.ne.s32.totalorder %s78, %s80
    %p84 = scmp.eq.s32.totalorder %s11, 0
    %p85 = por %p83, %p84
    %p86 = scmp.ne.s32.totalorder %s78, %s80
    %p87 = scmp.eq.s32.totalorder %s16, 3
    %p88 = por %p86, %p87
    %p89 = scmp.ne.s32.totalorder %s80, %s81
    %p90 = scmp.eq.s32.totalorder %s16, 0
    %p91 = por %p89, %p90
    %p92 = scmp.ne.s32.totalorder %s80, %s81
    %p93 = scmp.eq.s32.totalorder %s17, 3
    %p94 = por %p92, %p93
    %p96 = scmp.ne.s32.totalorder %s81, %s95
    %p97 = scmp.eq.s32.totalorder %s17, 0
    %p98 = por %p96, %p97
    %s100 = sadd.s32 %s99, 1
    %p103 = scmp.eq.s32.totalorder %s11, 3
    %p104 = scmp.ne.s32.totalorder %s99, %s101
    %p105 = scmp.eq.s32.totalorder %s11, 0
    %p106 = por %p104, %p105
    %p107 = scmp.ne.s32.totalorder %s99, %s101
    %p108 = scmp.eq.s32.totalorder %s16, 3
    %p109 = por %p107, %p108
    %p110 = scmp.ne.s32.totalorder %s101, %s102
    %p111 = scmp.eq.s32.totalorder %s16, 0
    %p112 = por %p110, %p111
    %p113 = scmp.ne.s32.totalorder %s101, %s102
    %p114 = scmp.eq.s32.totalorder %s17, 3
    %p115 = por %p113, %p114
    %p117 = scmp.ne.s32.totalorder %s102, %s116
    %p118 = scmp.eq.s32.totalorder %s17, 0
    %p119 = por %p117, %p118
    %s121 = sadd.s32 %s120, 1
    %p124 = scmp.eq.s32.totalorder %s11, 3
    %p125 = scmp.ne.s32.totalorder %s120, %s122
    %p126 = scmp.eq.s32.totalorder %s11, 0
    %p127 = por %p125, %p126
    %p128 = scmp.ne.s32.totalorder %s120, %s122
    %p129 = scmp.eq.s32.totalorder %s16, 3
    %p130 = por %p128, %p129
    %p131 = scmp.ne.s32.totalorder %s122, %s123
    %p132 = scmp.eq.s32.totalorder %s16, 0
    %p133 = por %p131, %p132
    %p134 = scmp.ne.s32.totalorder %s122, %s123
    %p135 = scmp.eq.s32.totalorder %s17, 3
    %p136 = por %p134, %p135
    %p138 = scmp.ne.s32.totalorder %s123, %s137
    %p139 = scmp.eq.s32.totalorder %s17, 0
    %p140 = por %p138, %p139
    %s141 = smul.u32 %s19, %s18
    %s142 = smul.u32 %s26, %s30
    %s143 = ssub.s32 %s141, %s142
    %p144 = scmp.eq.s32.totalorder %s143, 0
    %s146 = sadd.s32 %s145, 1
    %s147 = scalar_select %p144, %s145, %s146
    %p150 = pneg %p144
    %p151 = scmp.eq.s32.totalorder %s11, 3
    %p152 = por %p150, %p151
    %p153 = scmp.ne.s32.totalorder %s145, %s148
    %p154 = scmp.eq.s32.totalorder %s11, 0
    %p155 = por %p153, %p154
    %p156 = scmp.ne.s32.totalorder %s145, %s148
    %p157 = scmp.eq.s32.totalorder %s16, 3
    %p158 = por %p156, %p157
    %p159 = scmp.ne.s32.totalorder %s148, %s149
    %p160 = scmp.eq.s32.totalorder %s16, 0
    %p161 = por %p159, %p160
    %p162 = scmp.ne.s32.totalorder %s148, %s149
    %p163 = scmp.eq.s32.totalorder %s17, 3
    %p164 = por %p162, %p163
    %p166 = scmp.ne.s32.totalorder %s149, %s165
    %p167 = scmp.eq.s32.totalorder %s17, 0
    %p168 = por %p166, %p167
    %p169 = scmp.le.s32.totalorder 1, %s11
    %p170 = scmp.lt.s32.totalorder %s11, 5
    %p171 = pnand %p169, %p170
    %p172 = pneg %p171
    // Predicated region
    $region9: #{conv_block_forward.1} parent=5 // pred_check
      _
    $region10: #{conv_block_forward.1} parent=5 // pred_check_branch
      %174 = sbr.rel (%p171) target = $region12
    $region11: #{conv_block_forward.1} parent=5 // pred_region
      %s175 = ssub.s32 %s11, 1
      // Predicated region
      $region13: #{conv_block_forward.1} parent=11 // pred_check
        %p176 = pneg %p70
      $region14: #{conv_block_forward.1} parent=11 // pred_check_branch
        %178 = sbr.rel (%p176) target = $region16
      $region15: #{conv_block_forward.1} parent=11 // pred_region
        _
      $region16: #{conv_block_forward.1} parent=11 // pred_fallthru
        _
      // Predicated region
      $region17: #{conv_block_forward.1} parent=11 // pred_check
        %p179 = pneg %p91
      $region18: #{conv_block_forward.1} parent=11 // pred_check_branch
        %181 = sbr.rel (%p179) target = $region20
      $region19: #{conv_block_forward.1} parent=11 // pred_region
        _
      $region20: #{conv_block_forward.1} parent=11 // pred_fallthru
        _
      // Predicated region
      $region21: #{conv_block_forward.1} parent=11 // pred_check
        %p182 = pneg %p112
      $region22: #{conv_block_forward.1} parent=11 // pred_check_branch
        %184 = sbr.rel (%p182) target = $region24
      $region23: #{conv_block_forward.1} parent=11 // pred_region
        _
      $region24: #{conv_block_forward.1} parent=11 // pred_fallthru
        _
      // Predicated region
      $region25: #{conv_block_forward.1} parent=11 // pred_check
        %p185 = pneg %p133
      $region26: #{conv_block_forward.1} parent=11 // pred_check_branch
        %187 = sbr.rel (%p185) target = $region28
      $region27: #{conv_block_forward.1} parent=11 // pred_region
        _
      $region28: #{conv_block_forward.1} parent=11 // pred_fallthru
        _
    $region12: #{conv_block_forward.1} parent=5 // pred_fallthru
      _
    %p188 = scmp.lt.s32.totalorder %s11, 4
    // Predicated region
    $region29: #{conv_block_forward.1} parent=5 // pred_check
      %p189 = pneg %p188
    $region30: #{conv_block_forward.1} parent=5 // pred_check_branch
      %191 = sbr.rel (%p189) target = $region32
    $region31: #{conv_block_forward.1} parent=5 // pred_region
      // Predicated region
      $region33: #{conv_block_forward.1} parent=31 // pred_check
        %p192 = pneg %p43
      $region34: #{conv_block_forward.1} parent=31 // pred_check_branch
        %194 = sbr.rel (%p192) target = $region36
      $region35: #{conv_block_forward.1} parent=31 // pred_region
        %p195 = scmp.lt.s32.totalorder %s19, 1
        %s196 = scalar_select %p195, %s19, 1
        %s197 = smul.addr %s196, 15
        %s198 = smul.addr %s197, 8
        %s199 = scalar_lea.vmem %s0, %s198
      $region36: #{conv_block_forward.1} parent=31 // pred_fallthru
        _
    $region32: #{conv_block_forward.1} parent=5 // pred_fallthru
      _
    %p200 = scmp.le.s32.totalorder 1, %s11
    %p201 = scmp.lt.s32.totalorder %s11, 5
    %p202 = pnand %p200, %p201
    %p203 = pneg %p202
    // Predicated region
    $region37: #{conv_block_forward.1} parent=5 // pred_check
      _
    $region38: #{conv_block_forward.1} parent=5 // pred_check_branch
      %205 = sbr.rel (%p202) target = $region40
    $region39: #{conv_block_forward.1} parent=5 // pred_region
      %s206 = ssub.s32 %s11, 1
      %p207 = scmp.lt.s32.totalorder %s21, 1
      %s208 = scalar_select %p207, %s21, 1
      %s209 = smul.addr %s208, 15
      %s210 = smul.addr %s209, 8
      %s211 = scalar_lea.vmem %s0, %s210
      %p212 = pneg %p49
      %p213 = pneg %p46
      %p214 = pneg %p70
      %p215 = pneg %p67
      %p216 = pneg %p91
      %p217 = pneg %p88
      %p218 = pneg %p112
      %p219 = pneg %p109
      %p220 = pneg %p133
      %p221 = pneg %p130
      %p222 = pneg %p161
      %p223 = pneg %p158
      %s224 = smul.u32 %s21, %s20
      %p225 = scmp.lt.s32.totalorder %s224, 1
      %s226 = scalar_select %p225, %s224, 1
      %s227 = smul.addr %s226, 7
      %s228 = smul.addr %s227, 8
      %s229 = scalar_lea.vmem %s5, %s228
      %p230 = scmp.lt.s32.totalorder %s21, 1
      %s231 = scalar_select %p230, %s21, 1
      %s232 = smul.addr %s231, 15
      %s233 = smul.addr %s232, 8
      %s234 = scalar_lea.vmem %s0, %s233
      %s235 = smul.u32 %s21, %s20
      %p236 = scmp.lt.s32.totalorder %s235, 1
      %s237 = scalar_select %p236, %s235, 1
      %s238 = smul.addr %s237, 7
      %s239 = smul.addr %s238, 8
      %s240 = scalar_lea.vmem %s5, %s239
      %s241 = smul.u32 %s21, %s20
      %v242 = vld [vmem:[%s234] sm:$0xff]
      %v243 = vld [vmem:[%s234 + $0x8] sm:$0xff]
      %v244 = vld [vmem:[%s234 + $0x10] sm:$0xff]
      %v245 = vld [vmem:[%s234 + $0x18] sm:$0xff]
      %v246 = vld [vmem:[%s234 + $0x20] sm:$0xff]
      %v247 = vld [vmem:[%s234 + $0x28] sm:$0xff]
      %v248 = vld [vmem:[%s234 + $0x30] sm:$0xff]
      %v249 = vld [vmem:[%s234 + $0x38] sm:$0xff]
      %v250 = vld [vmem:[%s234 + $0x40] sm:$0xff]
      %v251 = vld [vmem:[%s234 + $0x48] sm:$0xff]
      %v252 = vld [vmem:[%s234 + $0x50] sm:$0xff]
      %v253 = vld [vmem:[%s234 + $0x58] sm:$0xff]
      %v254 = vld [vmem:[%s234 + $0x60] sm:$0xff]
      %v255 = vld [vmem:[%s234 + $0x68] sm:$0xff]
      %v256 = vld [vmem:[%s234 + $0x70] sm:$0xff]
      %v257 = vld [vmem:[%s1] sm:$0xff]
      %v258 = vld [vmem:[%s1 + $0x8] sm:$0xff]
      %v259 = vld [vmem:[%s1 + $0x10] sm:$0x3]
      %v260 = vld [vmem:[%s2] sm:$0xff]
      %v261 = vld [vmem:[%s2 + $0x8] sm:$0xff]
      %v262 = vld [vmem:[%s2 + $0x10] sm:$0x3]
      %vm278 = vcmask 1046528
      %v279 = vrot.slane %v242, 1
      %v280 = vrot.slane %v243, 1
      %v281 = vsel %vm278, %v279, %v280
      %v282 = vrot.slane %v244, 1
      %v283 = vsel %vm278, %v280, %v282
      %v284 = vrot.slane %v245, 1
      %v285 = vsel %vm278, %v282, %v284
      %v286 = vrot.slane %v246, 1
      %v287 = vsel %vm278, %v284, %v286
      %v288 = vrot.slane %v247, 1
      %v289 = vsel %vm278, %v286, %v288
      %v290 = vrot.slane %v248, 1
      %v291 = vsel %vm278, %v288, %v290
      %v292 = vrot.slane %v249, 1
      %v293 = vsel %vm278, %v290, %v292
      %v294 = vrot.slane %v250, 1
      %v295 = vsel %vm278, %v292, %v294
      %v296 = vrot.slane %v251, 1
      %v297 = vsel %vm278, %v294, %v296
      %v298 = vrot.slane %v252, 1
      %v299 = vsel %vm278, %v296, %v298
      %v300 = vrot.slane %v253, 1
      %v301 = vsel %vm278, %v298, %v300
      %v302 = vrot.slane %v254, 1
      %v303 = vsel %vm278, %v300, %v302
      %v304 = vrot.slane %v255, 1
      %v305 = vsel %vm278, %v302, %v304
      %v306 = vrot.slane %v256, 1
      %v307 = vsel %vm278, %v304, %v306
      %vm308 = vcmask 146432
      %v309 = vsel %vm308, %v281, 0
      %v311 = vsel %vm308, %v283, 0
      %v313 = vsel %vm308, %v285, 0
      %v315 = vsel %vm308, %v287, 0
      %v317 = vsel %vm308, %v289, 0
      %v319 = vsel %vm308, %v291, 0
      %v321 = vsel %vm308, %v293, 0
      %v323 = vsel %vm308, %v295, 0
      %v325 = vsel %vm308, %v297, 0
      %v327 = vsel %vm308, %v299, 0
      %v329 = vsel %vm308, %v301, 0
      %v331 = vsel %vm308, %v303, 0
      %v333 = vsel %vm308, %v305, 0
      %v335 = vsel %vm308, %v307, 0
      %vm337 = vcmask 1041408
      %v339 = vsel %vm337, %v262, 0
      %341 = vmatprep.subr.mxu0 0.0
      %342 = vmatpush1.msra.mxu0 %v260
      %343 = vmatprep.subr.mxu0 0.0
      %344 = vmatpush1.msra.mxu0 %v261
      %345 = vmatprep.subr.mxu0 0.0
      %346 = vmatpush1.msra.mxu0 %v339
      %347 = vmatprep.subr.mxu0 0.0
      %348 = vmatpush1.msra.mxu0 0.0
      %349 = vmatprep.subr.mxu0 0.0
      %350 = vmatpush1.msra.mxu0 0.0
      %351 = vmatprep.subr.mxu0 0.0
      %352 = vmatpush1.msra.mxu0 0.0
      %353 = vmatprep.subr.mxu0 0.0
      %354 = vmatpush1.msra.mxu0 0.0
      %355 = vmatprep.subr.mxu0 0.0
      %356 = vmatpush1.msra.mxu0 0.0
      %357 = vmatprep.subr.mxu0 0.0
      %358 = vmatpush1.msra.mxu0 0.0
      %359 = vmatprep.subr.mxu0 0.0
      %360 = vmatpush1.msra.mxu0 0.0
      %361 = vmatprep.subr.mxu0 0.0
      %362 = vmatpush1.msra.mxu0 0.0
      %363 = vmatprep.subr.mxu0 0.0
      %364 = vmatpush1.msra.mxu0 0.0
      %365 = vmatprep.subr.mxu0 0.0
      %366 = vmatpush1.msra.mxu0 0.0
      %367 = vmatprep.subr.mxu0 0.0
      %368 = vmatpush1.msra.mxu0 0.0
      %369 = vmatprep.subr.mxu0 0.0
      %370 = vmatpush1.msra.mxu0 0.0
      %371 = vmatprep.subr.mxu0 0.0
      %372 = vmatpush1.msra.mxu0 0.0
      %373 = vmatprep.subr.mxu0 0.0
      %374 = vmatpush1.msra.mxu0 0.0
      %375 = vmatprep.subr.mxu0 0.0
      %376 = vmatpush1.msra.mxu0 0.0
      %377 = vmatprep.subr.mxu0 0.0
      %378 = vmatpush1.msra.mxu0 0.0
      %379 = vmatprep.subr.mxu0 0.0
      %380 = vmatpush1.msra.mxu0 0.0
      %381 = vmatprep.subr.mxu0 0.0
      %382 = vmatpush1.msra.mxu0 0.0
      %383 = vmatprep.subr.mxu0 0.0
      %384 = vmatpush1.msra.mxu0 0.0
      %385 = vmatprep.subr.mxu0 0.0
      %386 = vmatpush1.msra.mxu0 0.0
      %387 = vmatprep.subr.mxu0 0.0
      %388 = vmatpush1.msra.mxu0 0.0
      %389 = vmatprep.subr.mxu0 0.0
      %390 = vmatpush1.msra.mxu0 0.0
      %391 = vmatprep.subr.mxu0 0.0
      %392 = vmatpush1.msra.mxu0 0.0
      %393 = vmatprep.subr.mxu0 0.0
      %394 = vmatpush1.msra.mxu0 0.0
      %395 = vmatprep.subr.mxu0 0.0
      %396 = vmatpush1.msra.mxu0 0.0
      %397 = vmatprep.subr.mxu0 0.0
      %398 = vmatpush1.msra.mxu0 0.0
      %399 = vmatprep.subr.mxu0 0.0
      %400 = vmatpush1.msra.mxu0 0.0
      %401 = vmatprep.subr.mxu0 0.0
      %402 = vmatpush1.msra.mxu0 0.0
      %403 = vmatprep.subr.mxu0 0.0
      %404 = vmatpush1.msra.mxu0 0.0
      %405 = vmatprep.mubr.f32.mxu0 0.0
      %406 = vmatmul.mubr.f32.gmra.mrb[0].mxu0 %v309
      %v407 = vpop.f32.mrb[0].mxu0
      %v408 = vadd.f32 0.0, %v407
      %v409 = vpop.f32.mrb[0].mxu0
      %410 = vmatprep.mubr.f32.mxu0 0.0
      %411 = vmatmul.mubr.f32.gmra.mrb[0].mxu0 %v311
      %v412 = vpop.f32.mrb[0].mxu0
      %v413 = vadd.f32 0.0, %v412
      %v414 = vpop.f32.mrb[0].mxu0
      %415 = vmatprep.mubr.f32.mxu0 0.0
      %416 = vmatmul.mubr.f32.gmra.mrb[0].mxu0 %v313
      %v417 = vpop.f32.mrb[0].mxu0
      %v418 = vadd.f32 0.0, %v417
      %v419 = vpop.f32.mrb[0].mxu0
      %420 = vmatprep.mubr.f32.mxu0 0.0
      %421 = vmatmul.mubr.f32.gmra.mrb[0].mxu0 %v315
      %v422 = vpop.f32.mrb[0].mxu0
      %v423 = vadd.f32 0.0, %v422
      %v424 = vpop.f32.mrb[0].mxu0
      %425 = vmatprep.mubr.f32.mxu0 0.0
      %426 = vmatmul.mubr.f32.gmra.mrb[0].mxu0 %v317
      %v427 = vpop.f32.mrb[0].mxu0
      %v428 = vadd.f32 0.0, %v427
      %v429 = vpop.f32.mrb[0].mxu0
      %430 = vmatprep.mubr.f32.mxu0 0.0
      %431 = vmatmul.mubr.f32.gmra.mrb[0].mxu0 %v319
      %v432 = vpop.f32.mrb[0].mxu0
      %v433 = vadd.f32 0.0, %v432
      %v434 = vpop.f32.mrb[0].mxu0
      %435 = vmatprep.mubr.f32.mxu0 0.0
      %436 = vmatmul.mubr.f32.gmra.mrb[0].mxu0 %v321
      %v437 = vpop.f32.mrb[0].mxu0
      %v438 = vadd.f32 0.0, %v437
      %v439 = vpop.f32.mrb[0].mxu0
      %440 = vmatprep.mubr.f32.mxu0 0.0
      %441 = vmatmul.mubr.f32.gmra.mrb[0].mxu0 %v323
      %v442 = vpop.f32.mrb[0].mxu0
      %v443 = vadd.f32 0.0, %v442
      %v444 = vpop.f32.mrb[0].mxu0
      %445 = vmatprep.mubr.f32.mxu0 0.0
      %446 = vmatmul.mubr.f32.gmra.mrb[0].mxu0 %v325
      %v447 = vpop.f32.mrb[0].mxu0
      %v448 = vadd.f32 0.0, %v447
      %v449 = vpop.f32.mrb[0].mxu0
      %450 = vmatprep.mubr.f32.mxu0 0.0
      %451 = vmatmul.mubr.f32.gmra.mrb[0].mxu0 %v327
      %v452 = vpop.f32.mrb[0].mxu0
      %v453 = vadd.f32 0.0, %v452
      %v454 = vpop.f32.mrb[0].mxu0
      %455 = vmatprep.mubr.f32.mxu0 0.0
      %456 = vmatmul.mubr.f32.gmra.mrb[0].mxu0 %v329
      %v457 = vpop.f32.mrb[0].mxu0
      %v458 = vadd.f32 0.0, %v457
      %v459 = vpop.f32.mrb[0].mxu0
      %460 = vmatprep.mubr.f32.mxu0 0.0
      %461 = vmatmul.mubr.f32.gmra.mrb[0].mxu0 %v331
      %v462 = vpop.f32.mrb[0].mxu0
      %v463 = vadd.f32 0.0, %v462
      %v464 = vpop.f32.mrb[0].mxu0
      %465 = vmatprep.mubr.f32.mxu0 0.0
      %466 = vmatmul.mubr.f32.gmra.mrb[0].mxu0 %v333
      %v467 = vpop.f32.mrb[0].mxu0
      %v468 = vadd.f32 0.0, %v467
      %v469 = vpop.f32.mrb[0].mxu0
      %470 = vmatprep.mubr.f32.mxu0 0.0
      %471 = vmatmul.mubr.f32.gmra.mrb[0].mxu0 %v335
      %v472 = vpop.f32.mrb[0].mxu0
      %v473 = vadd.f32 0.0, %v472
      %v474 = vpop.f32.mrb[0].mxu0
      %475 = vdwg.mxu0
      %v476 = vsel %vm308, %v242, 0
      %v478 = vsel %vm308, %v243, 0
      %v480 = vsel %vm308, %v244, 0
      %v482 = vsel %vm308, %v245, 0
      %v484 = vsel %vm308, %v246, 0
      %v486 = vsel %vm308, %v247, 0
      %v488 = vsel %vm308, %v248, 0
      %v490 = vsel %vm308, %v249, 0
      %v492 = vsel %vm308, %v250, 0
      %v494 = vsel %vm308, %v251, 0
      %v496 = vsel %vm308, %v252, 0
      %v498 = vsel %vm308, %v253, 0
      %v500 = vsel %vm308, %v254, 0
      %v502 = vsel %vm308, %v255, 0
      %v505 = vsel %vm337, %v259, 0
      %507 = vmatprep.subr.mxu0 0.0
      %508 = vmatpush1.msra.mxu0 %v257
      %509 = vmatprep.subr.mxu0 0.0
      %510 = vmatpush1.msra.mxu0 %v258
      %511 = vmatprep.subr.mxu0 0.0
      %512 = vmatpush1.msra.mxu0 %v505
      %513 = vmatprep.subr.mxu0 0.0
      %514 = vmatpush1.msra.mxu0 0.0
      %515 = vmatprep.subr.mxu0 0.0
      %516 = vmatpush1.msra.mxu0 0.0
      %517 = vmatprep.subr.mxu0 0.0
      %518 = vmatpush1.msra.mxu0 0.0
      %519 = vmatprep.subr.mxu0 0.0
      %520 = vmatpush1.msra.mxu0 0.0
      %521 = vmatprep.subr.mxu0 0.0
      %522 = vmatpush1.msra.mxu0 0.0
      %523 = vmatprep.subr.mxu0 0.0
      %524 = vmatpush1.msra.mxu0 0.0
      %525 = vmatprep.subr.mxu0 0.0
      %526 = vmatpush1.msra.mxu0 0.0
      %527 = vmatprep.subr.mxu0 0.0
      %528 = vmatpush1.msra.mxu0 0.0
      %529 = vmatprep.subr.mxu0 0.0
      %530 = vmatpush1.msra.mxu0 0.0
      %531 = vmatprep.subr.mxu0 0.0
      %532 = vmatpush1.msra.mxu0 0.0
      %533 = vmatprep.subr.mxu0 0.0
      %534 = vmatpush1.msra.mxu0 0.0
      %535 = vmatprep.subr.mxu0 0.0
      %536 = vmatpush1.msra.mxu0 0.0
      %537 = vmatprep.subr.mxu0 0.0
      %538 = vmatpush1.msra.mxu0 0.0
      %539 = vmatprep.subr.mxu0 0.0
      %540 = vmatpush1.msra.mxu0 0.0
      %541 = vmatprep.subr.mxu0 0.0
      %542 = vmatpush1.msra.mxu0 0.0
      %543 = vmatprep.subr.mxu0 0.0
      %544 = vmatpush1.msra.mxu0 0.0
      %545 = vmatprep.subr.mxu0 0.0
      %546 = vmatpush1.msra.mxu0 0.0
      %547 = vmatprep.subr.mxu0 0.0
      %548 = vmatpush1.msra.mxu0 0.0
      %549 = vmatprep.subr.mxu0 0.0
      %550 = vmatpush1.msra.mxu0 0.0
      %551 = vmatprep.subr.mxu0 0.0
      %552 = vmatpush1.msra.mxu0 0.0
      %553 = vmatprep.subr.mxu0 0.0
      %554 = vmatpush1.msra.mxu0 0.0
      %555 = vmatprep.subr.mxu0 0.0
      %556 = vmatpush1.msra.mxu0 0.0
      %557 = vmatprep.subr.mxu0 0.0
      %558 = vmatpush1.msra.mxu0 0.0
      %559 = vmatprep.subr.mxu0 0.0
      %560 = vmatpush1.msra.mxu0 0.0
      %561 = vmatprep.subr.mxu0 0.0
      %562 = vmatpush1.msra.mxu0 0.0
      %563 = vmatprep.subr.mxu0 0.0
      %564 = vmatpush1.msra.mxu0 0.0
      %565 = vmatprep.subr.mxu0 0.0
      %566 = vmatpush1.msra.mxu0 0.0
      %567 = vmatprep.subr.mxu0 0.0
      %568 = vmatpush1.msra.mxu0 0.0
      %569 = vmatprep.subr.mxu0 0.0
      %570 = vmatpush1.msra.mxu0 0.0
      %571 = vmatprep.mubr.f32.mxu0 0.0
      %572 = vmatmul.mubr.f32.gmra.mrb[0].mxu0 %v476
      %v573 = vpop.f32.mrb[0].mxu0
      %v574 = vadd.f32 %v408, %v573
      %v575 = vpop.f32.mrb[0].mxu0
      %576 = vmatprep.mubr.f32.mxu0 0.0
      %577 = vmatmul.mubr.f32.gmra.mrb[0].mxu0 %v478
      %v578 = vpop.f32.mrb[0].mxu0
      %v579 = vadd.f32 %v413, %v578
      %v580 = vpop.f32.mrb[0].mxu0
      %581 = vmatprep.mubr.f32.mxu0 0.0
      %582 = vmatmul.mubr.f32.gmra.mrb[0].mxu0 %v480
      %v583 = vpop.f32.mrb[0].mxu0
      %v584 = vadd.f32 %v418, %v583
      %v585 = vpop.f32.mrb[0].mxu0
      %586 = vmatprep.mubr.f32.mxu0 0.0
      %587 = vmatmul.mubr.f32.gmra.mrb[0].mxu0 %v482
      %v588 = vpop.f32.mrb[0].mxu0
      %v589 = vadd.f32 %v423, %v588
      %v590 = vpop.f32.mrb[0].mxu0
      %591 = vmatprep.mubr.f32.mxu0 0.0
      %592 = vmatmul.mubr.f32.gmra.mrb[0].mxu0 %v484
      %v593 = vpop.f32.mrb[0].mxu0
      %v594 = vadd.f32 %v428, %v593
      %v595 = vpop.f32.mrb[0].mxu0
      %596 = vmatprep.mubr.f32.mxu0 0.0
      %597 = vmatmul.mubr.f32.gmra.mrb[0].mxu0 %v486
      %v598 = vpop.f32.mrb[0].mxu0
      %v599 = vadd.f32 %v433, %v598
      %v600 = vpop.f32.mrb[0].mxu0
      %601 = vmatprep.mubr.f32.mxu0 0.0
      %602 = vmatmul.mubr.f32.gmra.mrb[0].mxu0 %v488
      %v603 = vpop.f32.mrb[0].mxu0
      %v604 = vadd.f32 %v438, %v603
      %v605 = vpop.f32.mrb[0].mxu0
      %606 = vmatprep.mubr.f32.mxu0 0.0
      %607 = vmatmul.mubr.f32.gmra.mrb[0].mxu0 %v490
      %v608 = vpop.f32.mrb[0].mxu0
      %v609 = vadd.f32 %v443, %v608
      %v610 = vpop.f32.mrb[0].mxu0
      %611 = vmatprep.mubr.f32.mxu0 0.0
      %612 = vmatmul.mubr.f32.gmra.mrb[0].mxu0 %v492
      %v613 = vpop.f32.mrb[0].mxu0
      %v614 = vadd.f32 %v448, %v613
      %v615 = vpop.f32.mrb[0].mxu0
      %616 = vmatprep.mubr.f32.mxu0 0.0
      %617 = vmatmul.mubr.f32.gmra.mrb[0].mxu0 %v494
      %v618 = vpop.f32.mrb[0].mxu0
      %v619 = vadd.f32 %v453, %v618
      %v620 = vpop.f32.mrb[0].mxu0
      %621 = vmatprep.mubr.f32.mxu0 0.0
      %622 = vmatmul.mubr.f32.gmra.mrb[0].mxu0 %v496
      %v623 = vpop.f32.mrb[0].mxu0
      %v624 = vadd.f32 %v458, %v623
      %v625 = vpop.f32.mrb[0].mxu0
      %626 = vmatprep.mubr.f32.mxu0 0.0
      %627 = vmatmul.mubr.f32.gmra.mrb[0].mxu0 %v498
      %v628 = vpop.f32.mrb[0].mxu0
      %v629 = vadd.f32 %v463, %v628
      %v630 = vpop.f32.mrb[0].mxu0
      %631 = vmatprep.mubr.f32.mxu0 0.0
      %632 = vmatmul.mubr.f32.gmra.mrb[0].mxu0 %v500
      %v633 = vpop.f32.mrb[0].mxu0
      %v634 = vadd.f32 %v468, %v633
      %v635 = vpop.f32.mrb[0].mxu0
      %636 = vmatprep.mubr.f32.mxu0 0.0
      %637 = vmatmul.mubr.f32.gmra.mrb[0].mxu0 %v502
      %v638 = vpop.f32.mrb[0].mxu0
      %v639 = vadd.f32 %v473, %v638
      %v640 = vpop.f32.mrb[0].mxu0
      %641 = vdwg.mxu0
      %p642 = scmp.eq.s32.totalorder %s20, 0
      %p643 = scmp.eq.s32.totalorder %s21, 0
      %p644 = pnand %p642, %p643
      %p645 = pneg %p644
      // Predicated region
      $region41: #{conv_block_forward.1} parent=39 // pred_check
        _
      $region42: #{conv_block_forward.1} parent=39 // pred_check_branch
        %647 = sbr.rel (%p644) target = $region44
      $region43: #{conv_block_forward.1} parent=39 // pred_region
        %648 = vst [vmem:[#allocation2] sm:$0x3] 0.0
      $region44: #{conv_block_forward.1} parent=39 // pred_fallthru
        _
      // Predicated region
      $region45: #{conv_block_forward.1} parent=39 // pred_check
        %p649 = pneg %p642
      $region46: #{conv_block_forward.1} parent=39 // pred_check_branch
        %651 = sbr.rel (%p649) target = $region48
      $region47: #{conv_block_forward.1} parent=39 // pred_region
        %v652 = vlaneseq
        %v653 = vshrl.u32 %v652, 7
        %v654 = vadd.s32 %v653, 8
        %v655 = vadd.s32 %v653, 16
        %v656 = vadd.s32 %v653, 24
        %v657 = vadd.s32 %v653, 32
        %v658 = vadd.s32 %v653, 40
        %v659 = vadd.s32 %v653, 48
        %v660 = vadd.s32 %v653, 56
        %v661 = vadd.s32 %v653, 64
        %v662 = vadd.s32 %v653, 72
        %v663 = vadd.s32 %v653, 80
        %v664 = vadd.s32 %v653, 88
        %v665 = vadd.s32 %v653, 96
        %v666 = vadd.s32 %v653, 104
        %vm667 = vcmp.lt.s32.totalorder %v653, 0
        %v668 = vsub.s32 0, %v653
        %v669 = vsel %vm667, %v668, %v653
        %v670 = vshrl.u32 %v669, 3
        %v671 = vand.u32 %v669, 7
        %v672 = vsub.s32 0, %v671
        %v673 = vsel %vm667, %v672, %v671
        %vm674 = vcmp.lt.s32.totalorder %v654, 0
        %v675 = vsub.s32 0, %v654
        %v676 = vsel %vm674, %v675, %v654
        %v677 = vshrl.u32 %v676, 3
        %v678 = vand.u32 %v676, 7
        %v679 = vsub.s32 0, %v678
        %v680 = vsel %vm674, %v679, %v678
        %vm681 = vcmp.lt.s32.totalorder %v655, 0
        %v682 = vsub.s32 0, %v655
        %v683 = vsel %vm681, %v682, %v655
        %v684 = vshrl.u32 %v683, 3
        %v685 = vand.u32 %v683, 7
        %v686 = vsub.s32 0, %v685
        %v687 = vsel %vm681, %v686, %v685
        %vm688 = vcmp.lt.s32.totalorder %v656, 0
        %v689 = vsub.s32 0, %v656
        %v690 = vsel %vm688, %v689, %v656
        %v691 = vshrl.u32 %v690, 3
        %v692 = vand.u32 %v690, 7
        %v693 = vsub.s32 0, %v692
        %v694 = vsel %vm688, %v693, %v692
        %vm695 = vcmp.lt.s32.totalorder %v657, 0
        %v696 = vsub.s32 0, %v657
        %v697 = vsel %vm695, %v696, %v657
        %v698 = vshrl.u32 %v697, 3
        %v699 = vand.u32 %v697, 7
        %v700 = vsub.s32 0, %v699
        %v701 = vsel %vm695, %v700, %v699
        %vm702 = vcmp.lt.s32.totalorder %v658, 0
        %v703 = vsub.s32 0, %v658
        %v704 = vsel %vm702, %v703, %v658
        %v705 = vshrl.u32 %v704, 3
        %v706 = vand.u32 %v704, 7
        %v707 = vsub.s32 0, %v706
        %v708 = vsel %vm702, %v707, %v706
        %vm709 = vcmp.lt.s32.totalorder %v659, 0
        %v710 = vsub.s32 0, %v659
        %v711 = vsel %vm709, %v710, %v659
        %v712 = vshrl.u32 %v711, 3
        %v713 = vand.u32 %v711, 7
        %v714 = vsub.s32 0, %v713
        %v715 = vsel %vm709, %v714, %v713
        %vm716 = vcmp.lt.s32.totalorder %v660, 0
        %v717 = vsub.s32 0, %v660
        %v718 = vsel %vm716, %v717, %v660
        %v719 = vshrl.u32 %v718, 3
        %v720 = vand.u32 %v718, 7
        %v721 = vsub.s32 0, %v720
        %v722 = vsel %vm716, %v721, %v720
        %vm723 = vcmp.lt.s32.totalorder %v661, 0
        %v724 = vsub.s32 0, %v661
        %v725 = vsel %vm723, %v724, %v661
        %v726 = vshrl.u32 %v725, 3
        %v727 = vand.u32 %v725, 7
        %v728 = vsub.s32 0, %v727
        %v729 = vsel %vm723, %v728, %v727
        %vm730 = vcmp.lt.s32.totalorder %v662, 0
        %v731 = vsub.s32 0, %v662
        %v732 = vsel %vm730, %v731, %v662
        %v733 = vshrl.u32 %v732, 3
        %v734 = vand.u32 %v732, 7
        %v735 = vsub.s32 0, %v734
        %v736 = vsel %vm730, %v735, %v734
        %vm737 = vcmp.lt.s32.totalorder %v663, 0
        %v738 = vsub.s32 0, %v663
        %v739 = vsel %vm737, %v738, %v663
        %v740 = vshrl.u32 %v739, 3
        %v741 = vand.u32 %v739, 7
        %v742 = vsub.s32 0, %v741
        %v743 = vsel %vm737, %v742, %v741
        %vm744 = vcmp.lt.s32.totalorder %v664, 0
        %v745 = vsub.s32 0, %v664
        %v746 = vsel %vm744, %v745, %v664
        %v747 = vshrl.u32 %v746, 3
        %v748 = vand.u32 %v746, 7
        %v749 = vsub.s32 0, %v748
        %v750 = vsel %vm744, %v749, %v748
        %vm751 = vcmp.lt.s32.totalorder %v665, 0
        %v752 = vsub.s32 0, %v665
        %v753 = vsel %vm751, %v752, %v665
        %v754 = vshrl.u32 %v753, 3
        %v755 = vand.u32 %v753, 7
        %v756 = vsub.s32 0, %v755
        %v757 = vsel %vm751, %v756, %v755
        %vm758 = vcmp.lt.s32.totalorder %v666, 0
        %v759 = vsub.s32 0, %v666
        %v760 = vsel %vm758, %v759, %v666
        %v761 = vshrl.u32 %v760, 3
        %v762 = vand.u32 %v760, 7
        %v763 = vsub.s32 0, %v762
        %v764 = vsel %vm758, %v763, %v762
        %vm765 = vcmp.ne.s32.totalorder %v673, 0
        %vm766 = vcmp.ne.s32.totalorder %v680, 0
        %vm767 = vcmp.ne.s32.totalorder %v687, 0
        %vm768 = vcmp.ne.s32.totalorder %v694, 0
        %vm769 = vcmp.ne.s32.totalorder %v701, 0
        %vm770 = vcmp.ne.s32.totalorder %v708, 0
        %vm771 = vcmp.ne.s32.totalorder %v715, 0
        %vm772 = vcmp.ne.s32.totalorder %v722, 0
        %vm773 = vcmp.ne.s32.totalorder %v729, 0
        %vm774 = vcmp.ne.s32.totalorder %v736, 0
        %vm775 = vcmp.ne.s32.totalorder %v743, 0
        %vm776 = vcmp.ne.s32.totalorder %v750, 0
        %vm777 = vcmp.ne.s32.totalorder %v757, 0
        %vm778 = vcmp.ne.s32.totalorder %v764, 0
        %vm779 = vcmp.lt.s32.totalorder %v673, 0
        %vm780 = vcmp.lt.s32.totalorder %v680, 0
        %vm781 = vcmp.lt.s32.totalorder %v687, 0
        %vm782 = vcmp.lt.s32.totalorder %v694, 0
        %vm783 = vcmp.lt.s32.totalorder %v701, 0
        %vm784 = vcmp.lt.s32.totalorder %v708, 0
        %vm785 = vcmp.lt.s32.totalorder %v715, 0
        %vm786 = vcmp.lt.s32.totalorder %v722, 0
        %vm787 = vcmp.lt.s32.totalorder %v729, 0
        %vm788 = vcmp.lt.s32.totalorder %v736, 0
        %vm789 = vcmp.lt.s32.totalorder %v743, 0
        %vm790 = vcmp.lt.s32.totalorder %v750, 0
        %vm791 = vcmp.lt.s32.totalorder %v757, 0
        %vm792 = vcmp.lt.s32.totalorder %v764, 0
        %vm793 = vmand %vm779, %vm765
        %vm794 = vmand %vm780, %vm766
        %vm795 = vmand %vm781, %vm767
        %vm796 = vmand %vm782, %vm768
        %vm797 = vmand %vm783, %vm769
        %vm798 = vmand %vm784, %vm770
        %vm799 = vmand %vm785, %vm771
        %vm800 = vmand %vm786, %vm772
        %vm801 = vmand %vm787, %vm773
        %vm802 = vmand %vm788, %vm774
        %vm803 = vmand %vm789, %vm775
        %vm804 = vmand %vm790, %vm776
        %vm805 = vmand %vm791, %vm777
        %vm806 = vmand %vm792, %vm778
        %v807 = vadd.s32 %v673, 8
        %v808 = vadd.s32 %v680, 8
        %v809 = vadd.s32 %v687, 8
        %v810 = vadd.s32 %v694, 8
        %v811 = vadd.s32 %v701, 8
        %v812 = vadd.s32 %v708, 8
        %v813 = vadd.s32 %v715, 8
        %v814 = vadd.s32 %v722, 8
        %v815 = vadd.s32 %v729, 8
        %v816 = vadd.s32 %v736, 8
        %v817 = vadd.s32 %v743, 8
        %v818 = vadd.s32 %v750, 8
        %v819 = vadd.s32 %v757, 8
        %v820 = vadd.s32 %v764, 8
        %v821 = vsel %vm793, %v807, %v673
        %v822 = vsel %vm794, %v808, %v680
        %v823 = vsel %vm795, %v809, %v687
        %v824 = vsel %vm796, %v810, %v694
        %v825 = vsel %vm797, %v811, %v701
        %v826 = vsel %vm798, %v812, %v708
        %v827 = vsel %vm799, %v813, %v715
        %v828 = vsel %vm800, %v814, %v722
        %v829 = vsel %vm801, %v815, %v729
        %v830 = vsel %vm802, %v816, %v736
        %v831 = vsel %vm803, %v817, %v743
        %v832 = vsel %vm804, %v818, %v750
        %v833 = vsel %vm805, %v819, %v757
        %v834 = vsel %vm806, %v820, %v764
        %vm835 = vcmp.lt.s32.totalorder %v821, 7
        %vm836 = vcmp.lt.s32.totalorder %v822, 7
        %vm837 = vcmp.lt.s32.totalorder %v823, 7
        %vm838 = vcmp.lt.s32.totalorder %v824, 7
        %vm839 = vcmp.lt.s32.totalorder %v825, 7
        %vm840 = vcmp.lt.s32.totalorder %v826, 7
        %vm841 = vcmp.lt.s32.totalorder %v827, 7
        %vm842 = vcmp.lt.s32.totalorder %v828, 7
        %vm843 = vcmp.lt.s32.totalorder %v829, 7
        %vm844 = vcmp.lt.s32.totalorder %v830, 7
        %vm845 = vcmp.lt.s32.totalorder %v831, 7
        %vm846 = vcmp.lt.s32.totalorder %v832, 7
        %vm847 = vcmp.lt.s32.totalorder %v833, 7
        %vm848 = vcmp.lt.s32.totalorder %v834, 7
        %v849 = vsel %vm835, 1, 0
        %v850 = vsel %vm836, 1, 0
        %v851 = vsel %vm837, 1, 0
        %v852 = vsel %vm838, 1, 0
        %v853 = vsel %vm839, 1, 0
        %v854 = vsel %vm840, 1, 0
        %v855 = vsel %vm841, 1, 0
        %v856 = vsel %vm842, 1, 0
        %v857 = vsel %vm843, 1, 0
        %v858 = vsel %vm844, 1, 0
        %v859 = vsel %vm845, 1, 0
        %v860 = vsel %vm846, 1, 0
        %v861 = vsel %vm847, 1, 0
        %v862 = vsel %vm848, 1, 0
        %vm863 = vcmp.eq.s32.totalorder %v849, 1
        %vm864 = vcmp.eq.s32.totalorder %v850, 1
        %vm865 = vcmp.eq.s32.totalorder %v851, 1
        %vm866 = vcmp.eq.s32.totalorder %v852, 1
        %vm867 = vcmp.eq.s32.totalorder %v853, 1
        %vm868 = vcmp.eq.s32.totalorder %v854, 1
        %vm869 = vcmp.eq.s32.totalorder %v855, 1
        %vm870 = vcmp.eq.s32.totalorder %v856, 1
        %vm871 = vcmp.eq.s32.totalorder %v857, 1
        %vm872 = vcmp.eq.s32.totalorder %v858, 1
        %vm873 = vcmp.eq.s32.totalorder %v859, 1
        %vm874 = vcmp.eq.s32.totalorder %v860, 1
        %vm875 = vcmp.eq.s32.totalorder %v861, 1
        %vm876 = vcmp.eq.s32.totalorder %v862, 1
        %v877 = vsel %vm863, %v574, 0.0
        %v878 = vsel %vm864, %v579, 0.0
        %v879 = vsel %vm865, %v584, 0.0
        %v880 = vsel %vm866, %v589, 0.0
        %v881 = vsel %vm867, %v594, 0.0
        %v882 = vsel %vm868, %v599, 0.0
        %v883 = vsel %vm869, %v604, 0.0
        %v884 = vsel %vm870, %v609, 0.0
        %v885 = vsel %vm871, %v614, 0.0
        %v886 = vsel %vm872, %v619, 0.0
        %v887 = vsel %vm873, %v624, 0.0
        %v888 = vsel %vm874, %v629, 0.0
        %v889 = vsel %vm875, %v634, 0.0
        %v890 = vsel %vm876, %v639, 0.0
        %v891 = vld [vmem:[#allocation2] sm:$0x1]
        %v892 = vadd.f32 %v877, %v878
        %v893 = vadd.f32 %v892, %v879
        %v894 = vadd.f32 %v893, %v880
        %v895 = vadd.f32 %v894, %v881
        %v896 = vadd.f32 %v895, %v882
        %v897 = vadd.f32 %v896, %v883
        %v898 = vadd.f32 %v897, %v884
        %v899 = vadd.f32 %v898, %v885
        %v900 = vadd.f32 %v899, %v886
        %v901 = vadd.f32 %v900, %v887
        %v902 = vadd.f32 %v901, %v888
        %v903 = vadd.f32 %v902, %v889
        %v904 = vadd.f32 %v903, %v890
        %v905 = vrot.slane %v904, 4
        %v906 = vadd.f32 %v904, %v905
        %v907 = vrot.slane %v906, 2
        %v908 = vadd.f32 %v906, %v907
        %v909 = vrot.slane %v908, 1
        %v910 = vadd.f32 %v908, %v909
        %v911 = vadd.f32 %v891, %v910
        %912 = vst [vmem:[#allocation2] sm:$0x1] %v911
        %v913 = vld [vmem:[#allocation2 + $0x1] sm:$0x1]
        %v914 = vmul.f32 %v877, %v877
        %v915 = vmul.f32 %v878, %v878
        %v916 = vmul.f32 %v879, %v879
        %v917 = vmul.f32 %v880, %v880
        %v918 = vmul.f32 %v881, %v881
        %v919 = vmul.f32 %v882, %v882
        %v920 = vmul.f32 %v883, %v883
        %v921 = vmul.f32 %v884, %v884
        %v922 = vmul.f32 %v885, %v885
        %v923 = vmul.f32 %v886, %v886
        %v924 = vmul.f32 %v887, %v887
        %v925 = vmul.f32 %v888, %v888
        %v926 = vmul.f32 %v889, %v889
        %v927 = vmul.f32 %v890, %v890
        %v928 = vadd.f32 %v914, %v915
        %v929 = vadd.f32 %v928, %v916
        %v930 = vadd.f32 %v929, %v917
        %v931 = vadd.f32 %v930, %v918
        %v932 = vadd.f32 %v931, %v919
        %v933 = vadd.f32 %v932, %v920
        %v934 = vadd.f32 %v933, %v921
        %v935 = vadd.f32 %v934, %v922
        %v936 = vadd.f32 %v935, %v923
        %v937 = vadd.f32 %v936, %v924
        %v938 = vadd.f32 %v937, %v925
        %v939 = vadd.f32 %v938, %v926
        %v940 = vadd.f32 %v939, %v927
        %v941 = vrot.slane %v940, 4
        %v942 = vadd.f32 %v940, %v941
        %v943 = vrot.slane %v942, 2
        %v944 = vadd.f32 %v942, %v943
        %v945 = vrot.slane %v944, 1
        %v946 = vadd.f32 %v944, %v945
        %v947 = vadd.f32 %v913, %v946
        %948 = vst [vmem:[#allocation2 + $0x1] sm:$0x1] %v947
      $region48: #{conv_block_forward.1} parent=39 // pred_fallthru
        _
      %p949 = scmp.eq.s32.totalorder %s20, 1
      %p950 = pnand %p949, %p643
      %p951 = pneg %p950
      // Predicated region
      $region49: #{conv_block_forward.1} parent=39 // pred_check
        _
      $region50: #{conv_block_forward.1} parent=39 // pred_check_branch
        %953 = sbr.rel (%p950) target = $region52
      $region51: #{conv_block_forward.1} parent=39 // pred_region
        %v954 = vld [vmem:[#allocation2] sm:$0x1]
        %v955 = vld [vmem:[#allocation2 + $0x1] sm:$0x1]
        %957 = vrot.lane.b32.xlu0 %v954, 64
        %v958 = vpop.permute.xlu0 %957
        %v960 = vadd.f32 %v954, %v958
        %962 = vrot.lane.b32.xlu0 %v955, 64
        %v963 = vpop.permute.xlu0 %962
        %v965 = vadd.f32 %v955, %v963
        %v966 = vmul.f32 %v960, 0.0025510204
        %v967 = vmul.f32 %v965, 0.0025510204
        %v968 = vmul.f32 %v966, %v966
        %v969 = vsub.f32 %v967, %v968
        %v970 = vmax.f32 %v969, 0.0
        %v971 = vld [vmem:[%s3] sm:$0x1]
        %v972 = vadd.f32 %v970, 1e-05
        %v973 = vrsqrt.pop %v972
        %v974 = vmul.f32 %v971, %v973
        %vm975 = vcmask 516096
        %976 = vst.msk [vmem:[#allocation3] sm:$0x1] %vm975, %v974
        %v977 = vld [vmem:[%s4] sm:$0x1]
        %v978 = vmul.f32 %v966, %v974
        %v979 = vsub.f32 %v977, %v978
        %980 = vst.msk [vmem:[#allocation3 + $0x1] sm:$0x1] %vm975, %v979
      $region52: #{conv_block_forward.1} parent=39 // pred_fallthru
        _
      // Predicated region
      $region53: #{conv_block_forward.1} parent=39 // pred_check
        %p981 = pneg %p949
      $region54: #{conv_block_forward.1} parent=39 // pred_check_branch
        %983 = sbr.rel (%p981) target = $region56
      $region55: #{conv_block_forward.1} parent=39 // pred_region
        %v984 = vld [vmem:[#allocation3] sm:$0x1]
        %v985 = vld [vmem:[#allocation3 + $0x1] sm:$0x1]
        %v986 = vlaneseq
        %v987 = vshrl.u32 %v986, 7
        %v988 = vsub.s32 0, %v987
        %v989 = vrot.slane %v984, %v988
        %v990 = vmul.f32 %v574, %v989
        %v991 = vmul.f32 %v579, %v989
        %v992 = vmul.f32 %v584, %v989
        %v993 = vmul.f32 %v589, %v989
        %v994 = vmul.f32 %v594, %v989
        %v995 = vmul.f32 %v599, %v989
        %v996 = vmul.f32 %v604, %v989
        %v997 = vmul.f32 %v609, %v989
        %v998 = vmul.f32 %v614, %v989
        %v999 = vmul.f32 %v619, %v989
        %v1000 = vmul.f32 %v624, %v989
        %v1001 = vmul.f32 %v629, %v989
        %v1002 = vmul.f32 %v634, %v989
        %v1003 = vmul.f32 %v639, %v989
        %v1004 = vlaneseq
        %v1005 = vshrl.u32 %v1004, 7
        %v1006 = vsub.s32 0, %v1005
        %v1007 = vrot.slane %v985, %v1006
        %v1008 = vadd.f32 %v990, %v1007
        %v1009 = vadd.f32 %v991, %v1007
        %v1010 = vadd.f32 %v992, %v1007
        %v1011 = vadd.f32 %v993, %v1007
        %v1012 = vadd.f32 %v994, %v1007
        %v1013 = vadd.f32 %v995, %v1007
        %v1014 = vadd.f32 %v996, %v1007
        %v1015 = vadd.f32 %v997, %v1007
        %v1016 = vadd.f32 %v998, %v1007
        %v1017 = vadd.f32 %v999, %v1007
        %v1018 = vadd.f32 %v1000, %v1007
        %v1019 = vadd.f32 %v1001, %v1007
        %v1020 = vadd.f32 %v1002, %v1007
        %v1021 = vadd.f32 %v1003, %v1007
        %v1022 = vmax.f32 %v1008, 0.0
        %v1023 = vmax.f32 %v1009, 0.0
        %v1024 = vmax.f32 %v1010, 0.0
        %v1025 = vmax.f32 %v1011, 0.0
        %v1026 = vmax.f32 %v1012, 0.0
        %v1027 = vmax.f32 %v1013, 0.0
        %v1028 = vmax.f32 %v1014, 0.0
        %v1029 = vmax.f32 %v1015, 0.0
        %v1030 = vmax.f32 %v1016, 0.0
        %v1031 = vmax.f32 %v1017, 0.0
        %v1032 = vmax.f32 %v1018, 0.0
        %v1033 = vmax.f32 %v1019, 0.0
        %v1034 = vmax.f32 %v1020, 0.0
        %v1035 = vmax.f32 %v1021, 0.0
        %1037 = vrot.lane.b32.xlu0 %v989, 64
        %v1038 = vpop.permute.xlu0 %1037
        %v1040 = vmul.f32 %v574, %v1038
        %v1041 = vmul.f32 %v579, %v1038
        %v1042 = vmul.f32 %v584, %v1038
        %v1043 = vmul.f32 %v589, %v1038
        %v1044 = vmul.f32 %v594, %v1038
        %v1045 = vmul.f32 %v599, %v1038
        %v1046 = vmul.f32 %v604, %v1038
        %v1047 = vmul.f32 %v609, %v1038
        %v1048 = vmul.f32 %v614, %v1038
        %v1049 = vmul.f32 %v619, %v1038
        %v1050 = vmul.f32 %v624, %v1038
        %v1051 = vmul.f32 %v629, %v1038
        %v1052 = vmul.f32 %v634, %v1038
        %v1053 = vmul.f32 %v639, %v1038
        %1055 = vrot.lane.b32.xlu0 %v1007, 64
        %v1056 = vpop.permute.xlu0 %1055
        %v1058 = vadd.f32 %v1040, %v1056
        %v1059 = vadd.f32 %v1041, %v1056
        %v1060 = vadd.f32 %v1042, %v1056
        %v1061 = vadd.f32 %v1043, %v1056
        %v1062 = vadd.f32 %v1044, %v1056
        %v1063 = vadd.f32 %v1045, %v1056
        %v1064 = vadd.f32 %v1046, %v1056
        %v1065 = vadd.f32 %v1047, %v1056
        %v1066 = vadd.f32 %v1048, %v1056
        %v1067 = vadd.f32 %v1049, %v1056
        %v1068 = vadd.f32 %v1050, %v1056
        %v1069 = vadd.f32 %v1051, %v1056
        %v1070 = vadd.f32 %v1052, %v1056
        %v1071 = vadd.f32 %v1053, %v1056
        %v1072 = vmax.f32 %v1058, 0.0
        %v1073 = vmax.f32 %v1059, 0.0
        %v1074 = vmax.f32 %v1060, 0.0
        %v1075 = vmax.f32 %v1061, 0.0
        %v1076 = vmax.f32 %v1062, 0.0
        %v1077 = vmax.f32 %v1063, 0.0
        %v1078 = vmax.f32 %v1064, 0.0
        %v1079 = vmax.f32 %v1065, 0.0
        %v1080 = vmax.f32 %v1066, 0.0
        %v1081 = vmax.f32 %v1067, 0.0
        %v1082 = vmax.f32 %v1068, 0.0
        %v1083 = vmax.f32 %v1069, 0.0
        %v1084 = vmax.f32 %v1070, 0.0
        %v1085 = vmax.f32 %v1071, 0.0
        %1100 = vrot.lane.b32.xlu0 %v1072, 64
        %v1101 = vpop.permute.xlu0 %1100
        %1102 = vrot.lane.b32.xlu0 %v1073, 64
        %v1103 = vpop.permute.xlu0 %1102
        %1104 = vrot.lane.b32.xlu0 %v1074, 64
        %v1105 = vpop.permute.xlu0 %1104
        %1106 = vrot.lane.b32.xlu0 %v1075, 64
        %v1107 = vpop.permute.xlu0 %1106
        %1108 = vrot.lane.b32.xlu0 %v1076, 64
        %v1109 = vpop.permute.xlu0 %1108
        %1110 = vrot.lane.b32.xlu0 %v1077, 64
        %v1111 = vpop.permute.xlu0 %1110
        %1112 = vrot.lane.b32.xlu0 %v1078, 64
        %v1113 = vpop.permute.xlu0 %1112
        %1114 = vrot.lane.b32.xlu0 %v1079, 64
        %v1115 = vpop.permute.xlu0 %1114
        %1116 = vrot.lane.b32.xlu0 %v1080, 64
        %v1117 = vpop.permute.xlu0 %1116
        %1118 = vrot.lane.b32.xlu0 %v1081, 64
        %v1119 = vpop.permute.xlu0 %1118
        %1120 = vrot.lane.b32.xlu0 %v1082, 64
        %v1121 = vpop.permute.xlu0 %1120
        %1122 = vrot.lane.b32.xlu0 %v1083, 64
        %v1123 = vpop.permute.xlu0 %1122
        %1124 = vrot.lane.b32.xlu0 %v1084, 64
        %v1125 = vpop.permute.xlu0 %1124
        %1126 = vrot.lane.b32.xlu0 %v1085, 64
        %v1127 = vpop.permute.xlu0 %1126
        %v1142 = vmax.f32 %v1022, %v1101
        %v1143 = vmax.f32 %v1023, %v1103
        %v1144 = vmax.f32 %v1024, %v1105
        %v1145 = vmax.f32 %v1025, %v1107
        %v1146 = vmax.f32 %v1026, %v1109
        %v1147 = vmax.f32 %v1027, %v1111
        %v1148 = vmax.f32 %v1028, %v1113
        %v1149 = vmax.f32 %v1029, %v1115
        %v1150 = vmax.f32 %v1030, %v1117
        %v1151 = vmax.f32 %v1031, %v1119
        %v1152 = vmax.f32 %v1032, %v1121
        %v1153 = vmax.f32 %v1033, %v1123
        %v1154 = vmax.f32 %v1034, %v1125
        %v1155 = vmax.f32 %v1035, %v1127
        %v1156 = vmax.f32 %v1142, %v1143
        %v1157 = vmax.f32 %v1144, %v1145
        %v1158 = vmax.f32 %v1146, %v1147
        %v1159 = vmax.f32 %v1148, %v1149
        %v1160 = vmax.f32 %v1150, %v1151
        %v1161 = vmax.f32 %v1152, %v1153
        %v1162 = vmax.f32 %v1154, %v1155
        %vm1163 = vcmask 523264
        %1164 = vst.msk [vmem:[%s240] sm:$0xff] %vm1163, %v1156
        %1165 = vst.msk [vmem:[%s240 + $0x8] sm:$0xff] %vm1163, %v1157
        %1166 = vst.msk [vmem:[%s240 + $0x10] sm:$0xff] %vm1163, %v1158
        %1167 = vst.msk [vmem:[%s240 + $0x18] sm:$0xff] %vm1163, %v1159
        %1168 = vst.msk [vmem:[%s240 + $0x20] sm:$0xff] %vm1163, %v1160
        %1169 = vst.msk [vmem:[%s240 + $0x28] sm:$0xff] %vm1163, %v1161
        %1170 = vst.msk [vmem:[%s240 + $0x30] sm:$0xff] %vm1163, %v1162
      $region56: #{conv_block_forward.1} parent=39 // pred_fallthru
        _
      %s1171 = smul.u32 %s21, %s20
      %p1172 = scmp.lt.s32.totalorder %s1171, 1
      %s1173 = scalar_select %p1172, %s1171, 1
      %s1174 = smul.addr %s1173, 7
      %s1175 = smul.addr %s1174, 8
      %s1176 = scalar_lea.vmem %s5, %s1175
      // Predicated region
      $region57: #{conv_block_forward.1} parent=39 // pred_check
        %p1177 = pneg %p158
      $region58: #{conv_block_forward.1} parent=39 // pred_check_branch
        %1179 = sbr.rel (%p1177) target = $region60
      $region59: #{conv_block_forward.1} parent=39 // pred_region
        %s1180 = smul.u32 %s21, %s20
      $region60: #{conv_block_forward.1} parent=39 // pred_fallthru
        _
    $region40: #{conv_block_forward.1} parent=5 // pred_fallthru
      _
    %p1181 = scmp.le.s32.totalorder 2, %s11
    // Predicated region
    $region61: #{conv_block_forward.1} parent=5 // pred_check
      %p1182 = pneg %p1181
    $region62: #{conv_block_forward.1} parent=5 // pred_check_branch
      %1184 = sbr.rel (%p1182) target = $region64
    $region63: #{conv_block_forward.1} parent=5 // pred_region
      %s1185 = ssub.s32 %s11, 2
      // Predicated region
      $region65: #{conv_block_forward.1} parent=63 // pred_check
        %p1186 = pneg %p164
      $region66: #{conv_block_forward.1} parent=63 // pred_check_branch
        %1188 = sbr.rel (%p1186) target = $region68
      $region67: #{conv_block_forward.1} parent=63 // pred_region
        %s1189 = smul.u32 %s23, %s22
        %p1190 = scmp.lt.s32.totalorder %s1189, 1
        %s1191 = scalar_select %p1190, %s1189, 1
        %s1192 = smul.addr %s1191, 7
        %s1193 = smul.addr %s1192, 8
        %s1194 = scalar_lea.vmem %s5, %s1193
      $region68: #{conv_block_forward.1} parent=63 // pred_fallthru
        _
    $region64: #{conv_block_forward.1} parent=5 // pred_fallthru
      _
  $region6: #{conv_block_forward.1} parent=0 // loop_footer
    %s15 = sadd.s32 1, %s11
  $region7: #{conv_block_forward.1} parent=0 // loop_footer_branch
    %10 = sbr.rel target = $region3
  $region8: #{conv_block_forward.1} parent=0 // loop_exit
    _

</llo_original>
